<compile_context>
chip_gen: v7x
topology: tpu7x:2x2x1
jax: 0.10.0
libtpu: 0.0.40
codegen_flags: <defaults>
</compile_context>

<pallas_src>
import functools

import jax
import jax.numpy as jnp
from jax.experimental import pallas as pl
from jax.experimental.pallas import tpu as pltpu


def _soft_xent_kernel(x_ref, t_ref, o_ref, *, hw, t_hw, ragged):
    """x_ref, t_ref: (b_n, C, t_hw) logit tiles.  o_ref: (b_n, 1, t_hw) partials."""
    x = x_ref[...].astype(jnp.float32)                      # input logits
    t = t_ref[...].astype(jnp.float32)                      # target logits

    # log_softmax(input) pieces over C (axis 1 -> sublanes), numerically stable.
    zx = x - jnp.max(x, axis=1, keepdims=True)              # (b_n, C, t_hw)
    sx = jnp.sum(jnp.exp(zx), axis=1, keepdims=True)        # (b_n, 1, t_hw)

    # softmax(target) pieces over C.
    et = jnp.exp(t - jnp.max(t, axis=1, keepdims=True))     # (b_n, C, t_hw)
    st = jnp.sum(et, axis=1, keepdims=True)                 # (b_n, 1, t_hw)

    # Per pixel: -(softmax(t) . log_softmax(x))
    #   = log(sx) - sum_c(et * zx) / st     (since sum_c softmax(t)_c == 1)
    dot = jnp.sum(et * zx, axis=1, keepdims=True)           # (b_n, 1, t_hw)
    row = jnp.log(sx) - dot / st                            # (b_n, 1, t_hw)

    if ragged:
        # Mask the out-of-bounds lanes of the last HW tile (OOB reads are
        # garbage; select 0 for them so the outer sum is exact).
        j = pl.program_id(1)
        lane = jax.lax.broadcasted_iota(jnp.int32, row.shape, dimension=2)
        row = jnp.where(j * t_hw + lane < hw, row, 0.0)

    o_ref[...] = row.astype(o_ref.dtype)


def _round_up(v, m):
    return (v + m - 1) // m * m


def _tile_plan(n, c, hw):
    """Pick (b_n, t_hw, n_hw, ragged, vmem_limit) for the (N, C, HW) problem."""
    try:
        vmem_cap = pltpu.get_tpu_info().vmem_capacity_bytes
    except Exception:
        vmem_cap = 64 << 20                  # conservative (v7x per-TC physical)

    c_pad = _round_up(c, 8)                  # sublane padding of the C axis
    # Per-operand, per-step budget: 2 operands x 2 pipeline buffers plus the
    # f32 compute temporaries must fit comfortably inside scoped VMEM on every
    # generation (v5e 16 MiB default, v6e 32 MiB, v7x 32 MiB / 64 MiB phys).
    budget = max(c_pad * 128 * 4, min(2 << 20, vmem_cap // 32))

    if hw <= 128:
        t_hw = hw                            # full extent -> legal block dim
    else:
        max_lanes = max(128, (budget // (c_pad * 4)) // 128 * 128)
        t_hw = min(max_lanes, hw // 128 * 128)
        # Prefer an exact multiple-of-128 divisor (no masked tail) if one
        # exists that is not much smaller than the budgeted tile.
        for cand in range(t_hw, 127, -128):
            if hw % cand == 0:
                if 2 * cand >= t_hw:
                    t_hw = cand
                break

    n_hw = pl.cdiv(hw, t_hw)
    ragged = (hw % t_hw) != 0

    # Batch blocking: grow b_n until each step moves ~budget bytes per operand,
    # amortizing the ~0.35-0.6 us fixed per-grid-step cost for small images.
    tile_bytes = c_pad * t_hw * 4
    b_n = int(max(1, min(n, budget // max(tile_bytes, 1))))
    while n % b_n:                           # largest divisor of n <= b_n
        b_n -= 1

    # Explicit scoped-VMEM limit sized from the working set (pipeline buffers
    # + f32 temporaries + slack), capped below physical VMEM.
    step_bytes = b_n * tile_bytes
    vmem_limit = int(min(0.9 * vmem_cap, max(16 << 20, 8 * step_bytes + (4 << 20))))
    return b_n, t_hw, n_hw, ragged, vmem_limit


@jax.jit
def soft_cross_entropy_loss(x, target):
    """Logits of shape (N, C, ...) with softmax over dim 1; matches the PyTorch module."""
    n, c = x.shape[0], x.shape[1]
    hw = 1
    for d in x.shape[2:]:
        hw *= d
    x3 = x.reshape(n, c, hw)                 # free views -- no transpose through HBM
    t3 = target.reshape(n, c, hw)

    b_n, t_hw, n_hw, ragged, vmem_limit = _tile_plan(n, c, hw)
    kernel = functools.partial(_soft_xent_kernel, hw=hw, t_hw=t_hw, ragged=ragged)

    # TODO(synk): for vocab-scale C, add a C grid axis with flash-softmax style
    # running max/sum scratch instead of holding all of C in one tile.

    partials = pl.pallas_call(
        kernel,
        out_shape=jax.ShapeDtypeStruct((n, 1, n_hw * t_hw), jnp.float32),
        grid_spec=pltpu.PrefetchScalarGridSpec(
            num_scalar_prefetch=0,
            grid=(n // b_n, n_hw),
            in_specs=[
                pl.BlockSpec((b_n, c, t_hw), lambda i, j: (i, 0, j)),
                pl.BlockSpec((b_n, c, t_hw), lambda i, j: (i, 0, j)),
            ],
            out_specs=pl.BlockSpec((b_n, 1, t_hw), lambda i, j: (i, 0, j)),
        ),
        compiler_params=pltpu.CompilerParams(
            # Each step writes its own output block -> both axes independent;
            # keeps both v7x TensorCores busy even when N is tiny.
            dimension_semantics=("parallel", "parallel"),
            vmem_limit_bytes=vmem_limit,
        ),
    )(x3, t3)

    # Kernel rows are already the NEGATED cross-entropy terms: no extra minus.
    # Tiny tree reduce outside the kernel + the module's 1/N normalization.
    return jnp.sum(partials) / n


def soft_cross_entropy_ref(x, target):
    """Pure-JAX reference matching the PyTorch module."""
    targetprobs = jax.nn.softmax(target, axis=1)
    logprobs = jax.nn.log_softmax(x, axis=1)
    return -jnp.sum(targetprobs * logprobs) / x.shape[0]


if __name__ == "__main__":
    key = jax.random.PRNGKey(0)
    k1, k2 = jax.random.split(key)
    # NCHW logits, softmax over C: batch=2, channels=4, spatial=16x16.
    x = jax.random.normal(k1, (2, 4, 16, 16), dtype=jnp.float32)
    target = jax.random.normal(k2, (2, 4, 16, 16), dtype=jnp.float32)

    out = soft_cross_entropy_loss(x, target)
    jax.block_until_ready(out)

    ref = soft_cross_entropy_ref(x, target)
    assert jnp.allclose(out, ref, rtol=1e-5, atol=1e-4), (out, ref)

    print("KERNEL_OK")
</pallas_src>

<mosaic_0001>
module attributes {stable_mosaic.version = 11 : i64} {
  func.func @_soft_xent_kernel(%arg0: i32, %arg1: i32, %arg2: memref<2x4x256xf32, #tpu.memory_space<vmem>>, %arg3: memref<2x4x256xf32, #tpu.memory_space<vmem>>, %arg4: memref<2x1x256xf32, #tpu.memory_space<vmem>>) attributes {dimension_semantics = [#tpu.dimension_semantics<parallel>, #tpu.dimension_semantics<parallel>], iteration_bounds = array<i64: 1, 1>, scalar_prefetch = 0 : i64, scratch_operands = 0 : i64, tpu.core_type = #tpu.core_type<tc>, window_params = [{transform_indices = @transform_0, window_bounds = array<i64: 2, 4, 256>}, {transform_indices = @transform_1, window_bounds = array<i64: 2, 4, 256>}, {transform_indices = @transform_2, window_bounds = array<i64: 2, 1, 256>}]} {
    %c0 = arith.constant 0 : index
    %c0_0 = arith.constant 0 : index
    %c0_1 = arith.constant 0 : index
    %0 = vector.load %arg2[%c0, %c0_0, %c0_1] : memref<2x4x256xf32, #tpu.memory_space<vmem>>, vector<2x4x256xf32>
    %c0_2 = arith.constant 0 : index
    %c0_3 = arith.constant 0 : index
    %c0_4 = arith.constant 0 : index
    %1 = vector.load %arg3[%c0_2, %c0_3, %c0_4] : memref<2x4x256xf32, #tpu.memory_space<vmem>>, vector<2x4x256xf32>
    %cst = arith.constant dense<0xFF800000> : vector<2x256xf32>
    %2 = vector.multi_reduction <maximumf>, %0, %cst [1] : vector<2x4x256xf32> to vector<2x256xf32>
    %3 = vector.shape_cast %2 : vector<2x256xf32> to vector<2x1x256xf32>
    %4 = vector.broadcast %3 : vector<2x1x256xf32> to vector<2x4x256xf32>
    %5 = arith.subf %0, %4 : vector<2x4x256xf32>
    %6 = math.exp %5 : vector<2x4x256xf32>
    %cst_5 = arith.constant dense<0.000000e+00> : vector<2x256xf32>
    %7 = vector.multi_reduction <add>, %6, %cst_5 [1] : vector<2x4x256xf32> to vector<2x256xf32>
    %8 = vector.shape_cast %7 : vector<2x256xf32> to vector<2x1x256xf32>
    %cst_6 = arith.constant dense<0xFF800000> : vector<2x256xf32>
    %9 = vector.multi_reduction <maximumf>, %1, %cst_6 [1] : vector<2x4x256xf32> to vector<2x256xf32>
    %10 = vector.shape_cast %9 : vector<2x256xf32> to vector<2x1x256xf32>
    %11 = vector.broadcast %10 : vector<2x1x256xf32> to vector<2x4x256xf32>
    %12 = arith.subf %1, %11 : vector<2x4x256xf32>
    %13 = math.exp %12 : vector<2x4x256xf32>
    %cst_7 = arith.constant dense<0.000000e+00> : vector<2x256xf32>
    %14 = vector.multi_reduction <add>, %13, %cst_7 [1] : vector<2x4x256xf32> to vector<2x256xf32>
    %15 = vector.shape_cast %14 : vector<2x256xf32> to vector<2x1x256xf32>
    %16 = arith.mulf %13, %5 : vector<2x4x256xf32>
    %cst_8 = arith.constant dense<0.000000e+00> : vector<2x256xf32>
    %17 = vector.multi_reduction <add>, %16, %cst_8 [1] : vector<2x4x256xf32> to vector<2x256xf32>
    %18 = vector.shape_cast %17 : vector<2x256xf32> to vector<2x1x256xf32>
    %19 = math.log %8 : vector<2x1x256xf32>
    %20 = arith.divf %18, %15 : vector<2x1x256xf32>
    %21 = arith.subf %19, %20 : vector<2x1x256xf32>
    %c0_9 = arith.constant 0 : index
    %c0_10 = arith.constant 0 : index
    %c0_11 = arith.constant 0 : index
    %22 = vector.load %arg4[%c0_9, %c0_10, %c0_11] : memref<2x1x256xf32, #tpu.memory_space<vmem>>, vector<2x1x256xf32>
    tpu.vector_store %arg4[%c0_9, %c0_10, %c0_11], %21 {strides = array<i32>} : memref<2x1x256xf32, #tpu.memory_space<vmem>>, vector<2x1x256xf32>,
    return
  }
  func.func @transform_0(%arg0: i32, %arg1: i32) -> (i32, i32, i32) {
    %c0_i32 = arith.constant 0 : i32
    %c0_i32_0 = arith.constant 0 : i32
    return %arg0, %c0_i32, %arg1 : i32, i32, i32
  }
  func.func @transform_1(%arg0: i32, %arg1: i32) -> (i32, i32, i32) {
    %c0_i32 = arith.constant 0 : i32
    %c0_i32_0 = arith.constant 0 : i32
    return %arg0, %c0_i32, %arg1 : i32, i32, i32
  }
  func.func @transform_2(%arg0: i32, %arg1: i32) -> (i32, i32, i32) {
    %c0_i32 = arith.constant 0 : i32
    %c0_i32_0 = arith.constant 0 : i32
    return %arg0, %c0_i32, %arg1 : i32, i32, i32
  }
}

</mosaic_0001>

<llo_original>
// kernel: soft_cross_entropy_loss.1
$region0: #{soft_cross_entropy_loss.1}
  #allocation0 [shape = 'u32[]', space=smem, size = 0x4, offset = 0x4, fixed_abs, tag = 'smem constant byte address 0x4 - core index']
  #allocation1 [shape = 'u32[144,128]{1,0:T(1,128)}', space=vmem, size = 0x12000, scoped, tag = 'internal scratch']
  %s0 = inlined_call_operand.vmem [shape: f32[2,4,256], index: 0, kind: input, shape index: {}]
  %s1 = inlined_call_operand.vmem [shape: f32[2,4,256], index: 1, kind: input, shape index: {}]
  %s2 = inlined_call_operand.vmem [shape: f32[2,1,256], index: 2, kind: output, shape index: {}]
  %s3 = sld [smem:[#allocation0]]
  $region18: #{soft_cross_entropy_loss.1} parent=0
    _
  %s5 = ssub.s32 1, %s3
  %s6 = scalar_select 0, %s5, %s3
  // Predicated region
  $region2: #{soft_cross_entropy_loss.1} parent=0 // pred_check
    _
  $region3: #{soft_cross_entropy_loss.1} parent=0 // pred_check_branch
    %8 = sbr.rel (0) target = $region5
  $region4: #{soft_cross_entropy_loss.1} parent=0 // pred_region
    _
  $region5: #{soft_cross_entropy_loss.1} parent=0 // pred_fallthru
    _
  // Predicated region
  $region6: #{soft_cross_entropy_loss.1} parent=0 // pred_check
    _
  $region7: #{soft_cross_entropy_loss.1} parent=0 // pred_check_branch
    %10 = sbr.rel (0) target = $region9
  $region8: #{soft_cross_entropy_loss.1} parent=0 // pred_region
    _
  $region9: #{soft_cross_entropy_loss.1} parent=0 // pred_fallthru
    _
  %v11 = vld [vmem:[%s0] sm:$0xff]
  %v12 = vld [vmem:[%s0 + $0x8] sm:$0xff]
  %v13 = vld [vmem:[%s1] sm:$0xff]
  %v14 = vld [vmem:[%s1 + $0x8] sm:$0xff]
  %v17 = vcombine.high %v11, %v11
  %v18 = vcombine.high %v12, %v12
  %vm21 = vcmask 1043456
  %v22 = vsel %vm21, %v11, -inf
  %v23 = vrot.slane %v22, 4
  %v24 = vmax.f32 %v22, %v23
  %v25 = vrot.slane %v24, 2
  %v26 = vmax.f32 %v24, %v25
  %v27 = vrot.slane %v26, 1
  %v28 = vmax.f32 %v26, %v27
  %v29 = vsel %vm21, %v17, -inf
  %v30 = vrot.slane %v29, 4
  %v31 = vmax.f32 %v29, %v30
  %v32 = vrot.slane %v31, 2
  %v33 = vmax.f32 %v31, %v32
  %v34 = vrot.slane %v33, 1
  %v35 = vmax.f32 %v33, %v34
  %v36 = vsel %vm21, %v12, -inf
  %v37 = vrot.slane %v36, 4
  %v38 = vmax.f32 %v36, %v37
  %v39 = vrot.slane %v38, 2
  %v40 = vmax.f32 %v38, %v39
  %v41 = vrot.slane %v40, 1
  %v42 = vmax.f32 %v40, %v41
  %v43 = vsel %vm21, %v18, -inf
  %v44 = vrot.slane %v43, 4
  %v45 = vmax.f32 %v43, %v44
  %v46 = vrot.slane %v45, 2
  %v47 = vmax.f32 %v45, %v46
  %v48 = vrot.slane %v47, 1
  %v49 = vmax.f32 %v47, %v48
  %v54 = vcombine.low %v28, %v35
  %v55 = vcombine.low %v42, %v49
  %v58 = vsub.f32 %v11, %v54
  %v59 = vsub.f32 %v12, %v55
  %v60 = vmul.f32 %v58, 1.442695
  %v61 = vpow.pop %v60
  %v62 = vmul.f32 %v59, 1.442695
  %v63 = vpow.pop %v62
  %v66 = vcombine.high %v61, %v61
  %v67 = vcombine.high %v63, %v63
  %v70 = vsel %vm21, %v61, 0.0
  %v71 = vrot.slane %v70, 4
  %v72 = vadd.f32 %v70, %v71
  %v73 = vrot.slane %v72, 2
  %v74 = vadd.f32 %v72, %v73
  %v75 = vrot.slane %v74, 1
  %v76 = vadd.f32 %v74, %v75
  %v77 = vsel %vm21, %v66, 0.0
  %v78 = vrot.slane %v77, 4
  %v79 = vadd.f32 %v77, %v78
  %v80 = vrot.slane %v79, 2
  %v81 = vadd.f32 %v79, %v80
  %v82 = vrot.slane %v81, 1
  %v83 = vadd.f32 %v81, %v82
  %v84 = vsel %vm21, %v63, 0.0
  %v85 = vrot.slane %v84, 4
  %v86 = vadd.f32 %v84, %v85
  %v87 = vrot.slane %v86, 2
  %v88 = vadd.f32 %v86, %v87
  %v89 = vrot.slane %v88, 1
  %v90 = vadd.f32 %v88, %v89
  %v91 = vsel %vm21, %v67, 0.0
  %v92 = vrot.slane %v91, 4
  %v93 = vadd.f32 %v91, %v92
  %v94 = vrot.slane %v93, 2
  %v95 = vadd.f32 %v93, %v94
  %v96 = vrot.slane %v95, 1
  %v97 = vadd.f32 %v95, %v96
  %v100 = vcombine.high %v13, %v13
  %v101 = vcombine.high %v14, %v14
  %v104 = vsel %vm21, %v13, -inf
  %v105 = vrot.slane %v104, 4
  %v106 = vmax.f32 %v104, %v105
  %v107 = vrot.slane %v106, 2
  %v108 = vmax.f32 %v106, %v107
  %v109 = vrot.slane %v108, 1
  %v110 = vmax.f32 %v108, %v109
  %v111 = vsel %vm21, %v100, -inf
  %v112 = vrot.slane %v111, 4
  %v113 = vmax.f32 %v111, %v112
  %v114 = vrot.slane %v113, 2
  %v115 = vmax.f32 %v113, %v114
  %v116 = vrot.slane %v115, 1
  %v117 = vmax.f32 %v115, %v116
  %v118 = vsel %vm21, %v14, -inf
  %v119 = vrot.slane %v118, 4
  %v120 = vmax.f32 %v118, %v119
  %v121 = vrot.slane %v120, 2
  %v122 = vmax.f32 %v120, %v121
  %v123 = vrot.slane %v122, 1
  %v124 = vmax.f32 %v122, %v123
  %v125 = vsel %vm21, %v101, -inf
  %v126 = vrot.slane %v125, 4
  %v127 = vmax.f32 %v125, %v126
  %v128 = vrot.slane %v127, 2
  %v129 = vmax.f32 %v127, %v128
  %v130 = vrot.slane %v129, 1
  %v131 = vmax.f32 %v129, %v130
  %v136 = vcombine.low %v110, %v117
  %v137 = vcombine.low %v124, %v131
  %v140 = vsub.f32 %v13, %v136
  %v141 = vsub.f32 %v14, %v137
  %v142 = vmul.f32 %v140, 1.442695
  %v143 = vpow.pop %v142
  %v144 = vmul.f32 %v141, 1.442695
  %v145 = vpow.pop %v144
  %v148 = vcombine.high %v143, %v143
  %v149 = vcombine.high %v145, %v145
  %v152 = vsel %vm21, %v143, 0.0
  %v153 = vrot.slane %v152, 4
  %v154 = vadd.f32 %v152, %v153
  %v155 = vrot.slane %v154, 2
  %v156 = vadd.f32 %v154, %v155
  %v157 = vrot.slane %v156, 1
  %v158 = vadd.f32 %v156, %v157
  %v159 = vsel %vm21, %v148, 0.0
  %v160 = vrot.slane %v159, 4
  %v161 = vadd.f32 %v159, %v160
  %v162 = vrot.slane %v161, 2
  %v163 = vadd.f32 %v161, %v162
  %v164 = vrot.slane %v163, 1
  %v165 = vadd.f32 %v163, %v164
  %v166 = vsel %vm21, %v145, 0.0
  %v167 = vrot.slane %v166, 4
  %v168 = vadd.f32 %v166, %v167
  %v169 = vrot.slane %v168, 2
  %v170 = vadd.f32 %v168, %v169
  %v171 = vrot.slane %v170, 1
  %v172 = vadd.f32 %v170, %v171
  %v173 = vsel %vm21, %v149, 0.0
  %v174 = vrot.slane %v173, 4
  %v175 = vadd.f32 %v173, %v174
  %v176 = vrot.slane %v175, 2
  %v177 = vadd.f32 %v175, %v176
  %v178 = vrot.slane %v177, 1
  %v179 = vadd.f32 %v177, %v178
  %v180 = vmul.f32 %v143, %v58
  %v181 = vmul.f32 %v145, %v59
  %v184 = vcombine.high %v180, %v180
  %v185 = vcombine.high %v181, %v181
  %v188 = vsel %vm21, %v180, 0.0
  %v189 = vrot.slane %v188, 4
  %v190 = vadd.f32 %v188, %v189
  %v191 = vrot.slane %v190, 2
  %v192 = vadd.f32 %v190, %v191
  %v193 = vrot.slane %v192, 1
  %v194 = vadd.f32 %v192, %v193
  %v195 = vsel %vm21, %v184, 0.0
  %v196 = vrot.slane %v195, 4
  %v197 = vadd.f32 %v195, %v196
  %v198 = vrot.slane %v197, 2
  %v199 = vadd.f32 %v197, %v198
  %v200 = vrot.slane %v199, 1
  %v201 = vadd.f32 %v199, %v200
  %v202 = vsel %vm21, %v181, 0.0
  %v203 = vrot.slane %v202, 4
  %v204 = vadd.f32 %v202, %v203
  %v205 = vrot.slane %v204, 2
  %v206 = vadd.f32 %v204, %v205
  %v207 = vrot.slane %v206, 1
  %v208 = vadd.f32 %v206, %v207
  %v209 = vsel %vm21, %v185, 0.0
  %v210 = vrot.slane %v209, 4
  %v211 = vadd.f32 %v209, %v210
  %v212 = vrot.slane %v211, 2
  %v213 = vadd.f32 %v211, %v212
  %v214 = vrot.slane %v213, 1
  %v215 = vadd.f32 %v213, %v214
  %v216 = vlog2.pop %v76
  %v217 = vmul.f32 %v216, 0.6931472
  %v218 = vlog2.pop %v83
  %v219 = vmul.f32 %v218, 0.6931472
  %v220 = vlog2.pop %v90
  %v221 = vmul.f32 %v220, 0.6931472
  %v222 = vlog2.pop %v97
  %v223 = vmul.f32 %v222, 0.6931472
  %v224 = vrcp.pop %v158
  %v225 = vmul.f32 %v194, %v224
  %v226 = vrcp.pop %v165
  %v227 = vmul.f32 %v201, %v226
  %v228 = vrcp.pop %v172
  %v229 = vmul.f32 %v208, %v228
  %v230 = vrcp.pop %v179
  %v231 = vmul.f32 %v215, %v230
  %v232 = vsub.f32 %v217, %v225
  %v233 = vsub.f32 %v219, %v227
  %v234 = vsub.f32 %v221, %v229
  %v235 = vsub.f32 %v223, %v231
  %v240 = vcombine.low %v232, %v233
  %v242 = vunpack.c.l.s4 1966171168
  %v243 = vunpack.c.0.s8 %v242
  %v244 = vlaneseq
  %v245 = vshrl.u32 %v244, 7
  %v246 = vsub.s32 %v243, %v245
  %v247 = vrot.slane %v240, %v246
  %v249 = vunpack.c.l.s4 1966171168
  %v250 = vunpack.c.0.s8 %v249
  %v251 = vlaneseq
  %v252 = vshrl.u32 %v251, 7
  %v253 = vsub.s32 %v250, %v252
  %v254 = vrot.slane %v247, %v253
  %v255 = vcombine.low %v234, %v235
  %v257 = vunpack.c.l.s4 1966171168
  %v258 = vunpack.c.0.s8 %v257
  %v259 = vlaneseq
  %v260 = vshrl.u32 %v259, 7
  %v261 = vsub.s32 %v258, %v260
  %v262 = vrot.slane %v255, %v261
  %v264 = vunpack.c.l.s4 1966171168
  %v265 = vunpack.c.0.s8 %v264
  %v266 = vlaneseq
  %v267 = vshrl.u32 %v266, 7
  %v268 = vsub.s32 %v265, %v267
  %v269 = vrot.slane %v262, %v268
  %v272 = vlaneseq
  %vm273 = vcmp.ge.s32.totalorder %v272, 0
  %vm274 = vcmp.lt.s32.totalorder %v272, 256
  %vm275 = vmand %vm273, %vm274
  %276 = vst.msk [vmem:[%s2] sm:$0x3] %vm275, %v254
  %277 = vst.msk [vmem:[%s2 + $0x2] sm:$0x3] %vm275, %v269
  // Predicated region
  $region10: #{soft_cross_entropy_loss.1} parent=0 // pred_check
    _
  $region11: #{soft_cross_entropy_loss.1} parent=0 // pred_check_branch
    %279 = sbr.rel (0) target = $region13
  $region12: #{soft_cross_entropy_loss.1} parent=0 // pred_region
    _
  $region13: #{soft_cross_entropy_loss.1} parent=0 // pred_fallthru
    _
  // Predicated region
  $region14: #{soft_cross_entropy_loss.1} parent=0 // pred_check
    _
  $region15: #{soft_cross_entropy_loss.1} parent=0 // pred_check_branch
    %281 = sbr.rel (0) target = $region17
  $region16: #{soft_cross_entropy_loss.1} parent=0 // pred_region
    _
  $region17: #{soft_cross_entropy_loss.1} parent=0 // pred_fallthru
    _

</llo_original>
